<compile_context>
chip_gen: v6e
topology: v6e:2x2x1
jax: 0.10.0
libtpu: 0.0.40
codegen_flags: <defaults>
</compile_context>

<pallas_src>
import math

import jax
import jax.numpy as jnp
from jax.experimental import pallas as pl
from jax.experimental.pallas import tpu as pltpu

# TODO(synk): exact UCB_K comes from scheduler/BaGTI/src/constants.py (not part
# of the module source); using 1.0 as a deterministic stand-in.
UCB_K = 1.0

_RELU_SCALE = math.sqrt(8.0 / math.pi)          # NPNRelu sigmoid-CDF scale
_INV_SQRT_2PI = 1.0 / math.sqrt(2.0 * math.pi)  # standard normal pdf constant
_XI_SQ = math.pi / 8.0                          # NPNSigmoid xi^2
_ALPHA = 4.0 - 2.0 * math.sqrt(2.0)             # NPNSigmoid alpha
_BETA = -math.log(math.sqrt(2.0) + 1.0)         # NPNSigmoid beta
_EPS = 1e-6

_D_IN = 10 * 14                                  # 140
_LAYER_DIMS = [(_D_IN, 128), (128, 128), (128, 64), (64, 1)]

_MAX_TILE = 512                                  # batch rows per grid step


# ----------------------------------------------------------------------------
# In-kernel NPN nonlinearities (moment matching), all f32 on the VPU/EUP
# ----------------------------------------------------------------------------
def _npn_relu(o_m, o_s):
    o_s = jnp.maximum(o_s, _EPS)
    r = jax.lax.rsqrt(o_s)                       # EUP
    z = o_m * r
    sqrt_s = o_s * r                             # == sqrt(o_s)
    # sigmoid(k*z) == 0.5*(1 + tanh(0.5*k*z)); tanh is a single EUP op while
    # sigmoid lowers to exp + reciprocal (two EUP pushes).
    cdf = 0.5 * (1.0 + jnp.tanh((0.5 * _RELU_SCALE) * z))
    pdf = sqrt_s * _INV_SQRT_2PI * jnp.exp(-0.5 * z * z)
    a_m = cdf * o_m + pdf
    a_s = cdf * (o_m * o_m + o_s) + o_m * pdf - a_m * a_m
    # rounding can push the matched variance slightly negative -> clamp so the
    # next layer's rsqrt stays finite.
    a_s = jnp.maximum(a_s, _EPS)
    return a_m, a_s


def _npn_sigmoid(o_m, o_s):
    a_m = jax.nn.sigmoid(o_m * jax.lax.rsqrt(1.0 + _XI_SQ * o_s))
    a_s = jax.nn.sigmoid(
        _ALPHA * (o_m + _BETA)
        * jax.lax.rsqrt(1.0 + _XI_SQ * _ALPHA * _ALPHA * o_s)) - a_m * a_m
    return a_m, a_s


# ----------------------------------------------------------------------------
# Fused forward kernel (one batch tile per grid step)
# ----------------------------------------------------------------------------
def _kernel(x_ref, w1_ref, w2m_ref, w2v_ref, w3m_ref, w3v_ref, p_ref, out_ref):
    f32 = jnp.float32
    bf16 = jnp.bfloat16

    x = x_ref[...]                               # (TB, 140) f32
    xb = x.astype(bf16)                          # bf16 MXU operand (mean path)
    x2b = (x * x).astype(bf16)                   # square in f32, then cast

    # small packed buffer (f32): biases (already softplus'ed) + layer-4 rows
    bm1 = p_ref[0:1, :]                          # (1, 128)
    bs1 = p_ref[1:2, :]
    bm2 = p_ref[2:3, :]
    bs2 = p_ref[3:4, :]
    bm3 = p_ref[4:5, :64]                        # (1, 64)
    bs3 = p_ref[5:6, :64]
    w4m = p_ref[6:7, :64]                        # mean weights (row)
    w4va = p_ref[7:8, :64]                       # softplus(Ws4) + Wm4^2
    w4vb = p_ref[8:9, :64]                       # softplus(Ws4)
    bm4 = p_ref[9:10, 0:1]                       # (1, 1)
    bs4 = p_ref[10:11, 0:1]

    # ---- layer 1 (dual_input=False: x_s = x_m^2)
    #      o_s = x^2 @ (2*softplus(Ws) + Wm^2) + b_s   (fused to one matmul)
    o_m = jnp.dot(xb, w1_ref[:, 0:128], preferred_element_type=f32) + bm1
    o_s = jnp.dot(x2b, w1_ref[:, 128:256], preferred_element_type=f32) + bs1
    m, s = _npn_relu(o_m, o_s)

    # ---- layer 2: o_s = x_s @ (Ws+Wm^2) + x_m^2 @ Ws + b_s
    #      two K=128 dots against static sublane slices of the stacked weight
    #      (no (TB,256) concat temporary)
    mb = m.astype(bf16)
    o_m = jnp.dot(mb, w2m_ref[...], preferred_element_type=f32) + bm2
    o_s = (jnp.dot(s.astype(bf16), w2v_ref[0:128, :], preferred_element_type=f32)
           + jnp.dot((m * m).astype(bf16), w2v_ref[128:256, :],
                     preferred_element_type=f32)
           + bs2)
    m, s = _npn_relu(o_m, o_s)

    # ---- layer 3 (same structure, output width 64)
    mb = m.astype(bf16)
    o_m = jnp.dot(mb, w3m_ref[...], preferred_element_type=f32) + bm3
    o_s = (jnp.dot(s.astype(bf16), w3v_ref[0:128, :], preferred_element_type=f32)
           + jnp.dot((m * m).astype(bf16), w3v_ref[128:256, :],
                     preferred_element_type=f32)
           + bs3)
    m, s = _npn_relu(o_m, o_s)

    # ---- layer 4 (out dim 1): VPU multiply + lane reduction, all f32
    o_m = jnp.sum(m * w4m, axis=-1, keepdims=True) + bm4
    o_s = jnp.sum(s * w4va + (m * m) * w4vb, axis=-1, keepdims=True) + bs4

    a_m, a_s = _npn_sigmoid(o_m, o_s)
    out_ref[...] = a_m + UCB_K * a_s


# ----------------------------------------------------------------------------
# Parameter init (mirrors NPNLinear.__init__) and one-time packing
# ----------------------------------------------------------------------------
def init_params(key):
    """Raw parameters (W_m, b_m, W_s_raw, b_s_raw) per layer, PyTorch scheme."""
    params = []
    for (din, dout) in _LAYER_DIMS:
        key, k1, k2, k3 = jax.random.split(key, 4)
        lim = math.sqrt(6.0) / math.sqrt(din + dout)
        wm = 2.0 * lim * (jax.random.uniform(k1, (din, dout), jnp.float32) - 0.5)
        bm = jnp.zeros((1, dout), jnp.float32)
        ws_raw = jnp.log(jnp.expm1(
            0.1 * lim * jax.random.uniform(k2, (din, dout), jnp.float32,
                                           minval=0.05, maxval=1.0)))
        bs_raw = jnp.log(jnp.expm1(
            0.01 * jax.random.uniform(k3, (1, dout), jnp.float32,
                                      minval=0.05, maxval=1.0)))
        params.append((wm, bm, ws_raw, bs_raw))
    return params


def pack_params(params):
    """Precompute static parameter transforms in f32, pack, cast MXU weights
    to bf16 (f32 accumulation is kept in-kernel)."""
    (w1m, b1m, w1sr, b1sr), (w2m, b2m, w2sr, b2sr), \
        (w3m, b3m, w3sr, b3sr), (w4m, b4m, w4sr, b4sr) = params
    sp = jax.nn.softplus                                   # numerically stable
    w1s, w2s, w3s, w4s = sp(w1sr), sp(w2sr), sp(w3sr), sp(w4sr)
    b1s, b2s, b3s, b4s = sp(b1sr), sp(b2sr), sp(b3sr), sp(b4sr)

    bf16 = jnp.bfloat16
    # layer 1 (x_s = x^2): o_s = x^2 @ (2*Ws + Wm^2) + b_s   -> pack [Wm | Wvar]
    w1_pack = jnp.concatenate([w1m, 2.0 * w1s + w1m * w1m], axis=1)   # (140,256)
    # layers 2/3: o_s = x_s @ (Ws + Wm^2) + x_m^2 @ Ws + b_s -> stack on K
    w2v = jnp.concatenate([w2s + w2m * w2m, w2s], axis=0)             # (256,128)
    w3v = jnp.concatenate([w3s + w3m * w3m, w3s], axis=0)             # (256, 64)

    # small buffer stays f32 (added to f32 accumulators / used on the VPU)
    small = jnp.zeros((11, 128), jnp.float32)
    small = small.at[0, :].set(b1m[0])
    small = small.at[1, :].set(b1s[0])
    small = small.at[2, :].set(b2m[0])
    small = small.at[3, :].set(b2s[0])
    small = small.at[4, :64].set(b3m[0])
    small = small.at[5, :64].set(b3s[0])
    small = small.at[6, :64].set(w4m[:, 0])
    small = small.at[7, :64].set((w4s + w4m * w4m)[:, 0])
    small = small.at[8, :64].set(w4s[:, 0])
    small = small.at[9, 0].set(b4m[0, 0])
    small = small.at[10, 0].set(b4s[0, 0])
    return (w1_pack.astype(bf16), w2m.astype(bf16), w2v.astype(bf16),
            w3m.astype(bf16), w3v.astype(bf16), small)


# ----------------------------------------------------------------------------
# Wrapper
# ----------------------------------------------------------------------------
def _bucket_batch(B):
    """Pad batch to a power of two (>= 8) so recompiles are bounded."""
    return max(8, 1 << (B - 1).bit_length())


def stochastic_energy_latency2_10(x, packed):
    """Single candidate (10,14) -> (1,1), or batch (B,10,14)/(B,140) -> (B,1)."""
    w1, w2m, w2v, w3m, w3v, small = packed
    x = jnp.asarray(x, jnp.float32)
    if x.size == _D_IN:                       # module semantics: x.reshape(1,-1)
        xb = x.reshape(1, _D_IN)
    else:                                      # batched candidate evaluation
        xb = x.reshape(-1, _D_IN)
    B = xb.shape[0]

    B_pad = _bucket_batch(B)
    # Large tile amortizes per-step overhead; batches > _MAX_TILE keep >= 2
    # grid steps so the "parallel" axis can shard over both v7x TensorCores.
    TB = min(_MAX_TILE, B_pad)
    if B_pad != B:
        xb = jnp.pad(xb, ((0, B_pad - B), (0, 0)))
    grid = (B_pad // TB,)

    out = pl.pallas_call(
        _kernel,
        out_shape=jax.ShapeDtypeStruct((B_pad, 1), jnp.float32),
        grid=grid,
        in_specs=[
            pl.BlockSpec((TB, _D_IN), lambda i: (i, 0)),     # x tile (f32)
            pl.BlockSpec((_D_IN, 256), lambda i: (0, 0)),    # layer-1 packed W (bf16)
            pl.BlockSpec((128, 128), lambda i: (0, 0)),      # W2 mean (bf16)
            pl.BlockSpec((256, 128), lambda i: (0, 0)),      # W2 var stacked (bf16)
            pl.BlockSpec((128, 64), lambda i: (0, 0)),       # W3 mean (bf16)
            pl.BlockSpec((256, 64), lambda i: (0, 0)),       # W3 var stacked (bf16)
            pl.BlockSpec((11, 128), lambda i: (0, 0)),       # biases + layer-4 (f32)
        ],
        out_specs=pl.BlockSpec((TB, 1), lambda i: (i, 0)),
        compiler_params=pltpu.CompilerParams(
            dimension_semantics=("parallel",)),
    )(xb, w1, w2m, w2v, w3m, w3v, small)
    return out[:B]


if __name__ == "__main__":
    key = jax.random.PRNGKey(0)
    kx, kp = jax.random.split(key)
    params = init_params(kp)
    packed = pack_params(params)          # one-time precompute (not per call)

    # batch of candidate placements, each a 10x14 feature matrix
    xb = jax.random.uniform(kx, (16, 10, 14), jnp.float32)

    # single-candidate call (matches the module's x.reshape(1, -1) semantics)
    out1 = stochastic_energy_latency2_10(xb[0], packed)
    jax.block_until_ready(out1)
    assert out1.shape == (1, 1) and bool(jnp.isfinite(out1).all())

    # batched call (amortizes pallas_call / DMA overhead across candidates)
    outb = stochastic_energy_latency2_10(xb, packed)
    jax.block_until_ready(outb)
    assert outb.shape == (16, 1) and bool(jnp.isfinite(outb).all())
    assert bool(jnp.allclose(outb[0:1], out1, rtol=1e-5, atol=1e-5))

    print("KERNEL_OK")
</pallas_src>

<mosaic_0001>
module attributes {stable_mosaic.version = 11 : i64} {
  func.func @_kernel(%arg0: i32, %arg1: memref<8x140xf32, #tpu.memory_space<vmem>>, %arg2: memref<140x256xbf16, #tpu.memory_space<vmem>>, %arg3: memref<128x128xbf16, #tpu.memory_space<vmem>>, %arg4: memref<256x128xbf16, #tpu.memory_space<vmem>>, %arg5: memref<128x64xbf16, #tpu.memory_space<vmem>>, %arg6: memref<256x64xbf16, #tpu.memory_space<vmem>>, %arg7: memref<11x128xf32, #tpu.memory_space<vmem>>, %arg8: memref<8x1xf32, #tpu.memory_space<vmem>>) attributes {dimension_semantics = [#tpu.dimension_semantics<parallel>], iteration_bounds = array<i64: 1>, scalar_prefetch = 0 : i64, scratch_operands = 0 : i64, tpu.core_type = #tpu.core_type<tc>, window_params = [{transform_indices = @transform_0, window_bounds = array<i64: 8, 140>}, {pipeline_mode = #tpu.pipeline_mode<synchronous>, transform_indices = @transform_1, window_bounds = array<i64: 140, 256>}, {pipeline_mode = #tpu.pipeline_mode<synchronous>, transform_indices = @transform_2, window_bounds = array<i64: 128, 128>}, {pipeline_mode = #tpu.pipeline_mode<synchronous>, transform_indices = @transform_3, window_bounds = array<i64: 256, 128>}, {pipeline_mode = #tpu.pipeline_mode<synchronous>, transform_indices = @transform_4, window_bounds = array<i64: 128, 64>}, {pipeline_mode = #tpu.pipeline_mode<synchronous>, transform_indices = @transform_5, window_bounds = array<i64: 256, 64>}, {pipeline_mode = #tpu.pipeline_mode<synchronous>, transform_indices = @transform_6, window_bounds = array<i64: 11, 128>}, {transform_indices = @transform_7, window_bounds = array<i64: 8, 1>}]} {
    %c0 = arith.constant 0 : index
    %c0_0 = arith.constant 0 : index
    %0 = vector.load %arg1[%c0, %c0_0] : memref<8x140xf32, #tpu.memory_space<vmem>>, vector<8x140xf32>
    %1 = arith.truncf %0 : vector<8x140xf32> to vector<8x140xbf16>
    %2 = arith.mulf %0, %0 : vector<8x140xf32>
    %3 = arith.truncf %2 : vector<8x140xf32> to vector<8x140xbf16>
    %c0_1 = arith.constant 0 : index
    %c0_2 = arith.constant 0 : index
    %4 = vector.load %arg7[%c0_1, %c0_2] : memref<11x128xf32, #tpu.memory_space<vmem>>, vector<1x128xf32>
    %c1 = arith.constant 1 : index
    %c0_3 = arith.constant 0 : index
    %5 = vector.load %arg7[%c1, %c0_3] : memref<11x128xf32, #tpu.memory_space<vmem>>, vector<1x128xf32>
    %c2 = arith.constant 2 : index
    %c0_4 = arith.constant 0 : index
    %6 = vector.load %arg7[%c2, %c0_4] : memref<11x128xf32, #tpu.memory_space<vmem>>, vector<1x128xf32>
    %c3 = arith.constant 3 : index
    %c0_5 = arith.constant 0 : index
    %7 = vector.load %arg7[%c3, %c0_5] : memref<11x128xf32, #tpu.memory_space<vmem>>, vector<1x128xf32>
    %c4 = arith.constant 4 : index
    %c0_6 = arith.constant 0 : index
    %8 = vector.load %arg7[%c4, %c0_6] : memref<11x128xf32, #tpu.memory_space<vmem>>, vector<1x64xf32>
    %c5 = arith.constant 5 : index
    %c0_7 = arith.constant 0 : index
    %9 = vector.load %arg7[%c5, %c0_7] : memref<11x128xf32, #tpu.memory_space<vmem>>, vector<1x64xf32>
    %c6 = arith.constant 6 : index
    %c0_8 = arith.constant 0 : index
    %10 = vector.load %arg7[%c6, %c0_8] : memref<11x128xf32, #tpu.memory_space<vmem>>, vector<1x64xf32>
    %c7 = arith.constant 7 : index
    %c0_9 = arith.constant 0 : index
    %11 = vector.load %arg7[%c7, %c0_9] : memref<11x128xf32, #tpu.memory_space<vmem>>, vector<1x64xf32>
    %c8 = arith.constant 8 : index
    %c0_10 = arith.constant 0 : index
    %12 = vector.load %arg7[%c8, %c0_10] : memref<11x128xf32, #tpu.memory_space<vmem>>, vector<1x64xf32>
    %c9 = arith.constant 9 : index
    %c0_11 = arith.constant 0 : index
    %13 = vector.load %arg7[%c9, %c0_11] : memref<11x128xf32, #tpu.memory_space<vmem>>, vector<1x1xf32>
    %c10 = arith.constant 10 : index
    %c0_12 = arith.constant 0 : index
    %14 = vector.load %arg7[%c10, %c0_12] : memref<11x128xf32, #tpu.memory_space<vmem>>, vector<1x1xf32>
    %c0_13 = arith.constant 0 : index
    %c0_14 = arith.constant 0 : index
    %15 = vector.load %arg2[%c0_13, %c0_14] : memref<140x256xbf16, #tpu.memory_space<vmem>>, vector<140x128xbf16>
    %cst = arith.constant dense<0.000000e+00> : vector<8x128xf32>
    %16 = tpu.matmul %1, %15, %cst {dimension_numbers = #tpu.dot_dimension_numbers<[1], [0], [0], [1], [0, 0, 1, 1], [], []>} : vector<8x140xbf16>, vector<140x128xbf16>, vector<8x128xf32> -> vector<8x128xf32>
    %17 = vector.broadcast %4 : vector<1x128xf32> to vector<8x128xf32>
    %18 = arith.addf %16, %17 : vector<8x128xf32>
    %c0_15 = arith.constant 0 : index
    %c128 = arith.constant 128 : index
    %19 = vector.load %arg2[%c0_15, %c128] : memref<140x256xbf16, #tpu.memory_space<vmem>>, vector<140x128xbf16>
    %cst_16 = arith.constant dense<0.000000e+00> : vector<8x128xf32>
    %20 = tpu.matmul %3, %19, %cst_16 {dimension_numbers = #tpu.dot_dimension_numbers<[1], [0], [0], [1], [0, 0, 1, 1], [], []>} : vector<8x140xbf16>, vector<140x128xbf16>, vector<8x128xf32> -> vector<8x128xf32>
    %21 = vector.broadcast %5 : vector<1x128xf32> to vector<8x128xf32>
    %22 = arith.addf %20, %21 : vector<8x128xf32>
    %cst_17 = arith.constant 9.99999997E-7 : f32
    %23 = vector.broadcast %cst_17 : f32 to vector<8x128xf32>
    %24 = arith.maximumf %22, %23 : vector<8x128xf32>
    %25 = math.rsqrt %24 : vector<8x128xf32>
    %26 = arith.mulf %18, %25 : vector<8x128xf32>
    %27 = arith.mulf %24, %25 : vector<8x128xf32>
    %cst_18 = arith.constant 0.797884583 : f32
    %28 = vector.broadcast %cst_18 : f32 to vector<8x128xf32>
    %29 = arith.mulf %28, %26 : vector<8x128xf32>
    %30 = math.tanh %29 : vector<8x128xf32>
    %cst_19 = arith.constant 1.000000e+00 : f32
    %31 = vector.broadcast %cst_19 : f32 to vector<8x128xf32>
    %32 = arith.addf %31, %30 : vector<8x128xf32>
    %cst_20 = arith.constant 5.000000e-01 : f32
    %33 = vector.broadcast %cst_20 : f32 to vector<8x128xf32>
    %34 = arith.mulf %33, %32 : vector<8x128xf32>
    %cst_21 = arith.constant 0.398942292 : f32
    %35 = vector.broadcast %cst_21 : f32 to vector<8x128xf32>
    %36 = arith.mulf %27, %35 : vector<8x128xf32>
    %cst_22 = arith.constant -5.000000e-01 : f32
    %37 = vector.broadcast %cst_22 : f32 to vector<8x128xf32>
    %38 = arith.mulf %37, %26 : vector<8x128xf32>
    %39 = arith.mulf %38, %26 : vector<8x128xf32>
    %40 = math.exp %39 : vector<8x128xf32>
    %41 = arith.mulf %36, %40 : vector<8x128xf32>
    %42 = arith.mulf %34, %18 : vector<8x128xf32>
    %43 = arith.addf %42, %41 : vector<8x128xf32>
    %44 = arith.mulf %18, %18 : vector<8x128xf32>
    %45 = arith.addf %44, %24 : vector<8x128xf32>
    %46 = arith.mulf %34, %45 : vector<8x128xf32>
    %47 = arith.mulf %18, %41 : vector<8x128xf32>
    %48 = arith.addf %46, %47 : vector<8x128xf32>
    %49 = arith.mulf %43, %43 : vector<8x128xf32>
    %50 = arith.subf %48, %49 : vector<8x128xf32>
    %cst_23 = arith.constant 9.99999997E-7 : f32
    %51 = vector.broadcast %cst_23 : f32 to vector<8x128xf32>
    %52 = arith.maximumf %50, %51 : vector<8x128xf32>
    %53 = arith.truncf %43 : vector<8x128xf32> to vector<8x128xbf16>
    %c0_24 = arith.constant 0 : index
    %c0_25 = arith.constant 0 : index
    %54 = vector.load %arg3[%c0_24, %c0_25] : memref<128x128xbf16, #tpu.memory_space<vmem>>, vector<128x128xbf16>
    %cst_26 = arith.constant dense<0.000000e+00> : vector<8x128xf32>
    %55 = tpu.matmul %53, %54, %cst_26 {dimension_numbers = #tpu.dot_dimension_numbers<[1], [0], [0], [1], [0, 0, 1, 1], [], []>} : vector<8x128xbf16>, vector<128x128xbf16>, vector<8x128xf32> -> vector<8x128xf32>
    %56 = vector.broadcast %6 : vector<1x128xf32> to vector<8x128xf32>
    %57 = arith.addf %55, %56 : vector<8x128xf32>
    %58 = arith.truncf %52 : vector<8x128xf32> to vector<8x128xbf16>
    %c0_27 = arith.constant 0 : index
    %c0_28 = arith.constant 0 : index
    %59 = vector.load %arg4[%c0_27, %c0_28] : memref<256x128xbf16, #tpu.memory_space<vmem>>, vector<128x128xbf16>
    %cst_29 = arith.constant dense<0.000000e+00> : vector<8x128xf32>
    %60 = tpu.matmul %58, %59, %cst_29 {dimension_numbers = #tpu.dot_dimension_numbers<[1], [0], [0], [1], [0, 0, 1, 1], [], []>} : vector<8x128xbf16>, vector<128x128xbf16>, vector<8x128xf32> -> vector<8x128xf32>
    %61 = arith.mulf %43, %43 : vector<8x128xf32>
    %62 = arith.truncf %61 : vector<8x128xf32> to vector<8x128xbf16>
    %c128_30 = arith.constant 128 : index
    %c0_31 = arith.constant 0 : index
    %63 = vector.load %arg4[%c128_30, %c0_31] : memref<256x128xbf16, #tpu.memory_space<vmem>>, vector<128x128xbf16>
    %cst_32 = arith.constant dense<0.000000e+00> : vector<8x128xf32>
    %64 = tpu.matmul %62, %63, %cst_32 {dimension_numbers = #tpu.dot_dimension_numbers<[1], [0], [0], [1], [0, 0, 1, 1], [], []>} : vector<8x128xbf16>, vector<128x128xbf16>, vector<8x128xf32> -> vector<8x128xf32>
    %65 = arith.addf %60, %64 : vector<8x128xf32>
    %66 = vector.broadcast %7 : vector<1x128xf32> to vector<8x128xf32>
    %67 = arith.addf %65, %66 : vector<8x128xf32>
    %cst_33 = arith.constant 9.99999997E-7 : f32
    %68 = vector.broadcast %cst_33 : f32 to vector<8x128xf32>
    %69 = arith.maximumf %67, %68 : vector<8x128xf32>
    %70 = math.rsqrt %69 : vector<8x128xf32>
    %71 = arith.mulf %57, %70 : vector<8x128xf32>
    %72 = arith.mulf %69, %70 : vector<8x128xf32>
    %cst_34 = arith.constant 0.797884583 : f32
    %73 = vector.broadcast %cst_34 : f32 to vector<8x128xf32>
    %74 = arith.mulf %73, %71 : vector<8x128xf32>
    %75 = math.tanh %74 : vector<8x128xf32>
    %cst_35 = arith.constant 1.000000e+00 : f32
    %76 = vector.broadcast %cst_35 : f32 to vector<8x128xf32>
    %77 = arith.addf %76, %75 : vector<8x128xf32>
    %cst_36 = arith.constant 5.000000e-01 : f32
    %78 = vector.broadcast %cst_36 : f32 to vector<8x128xf32>
    %79 = arith.mulf %78, %77 : vector<8x128xf32>
    %cst_37 = arith.constant 0.398942292 : f32
    %80 = vector.broadcast %cst_37 : f32 to vector<8x128xf32>
    %81 = arith.mulf %72, %80 : vector<8x128xf32>
    %cst_38 = arith.constant -5.000000e-01 : f32
    %82 = vector.broadcast %cst_38 : f32 to vector<8x128xf32>
    %83 = arith.mulf %82, %71 : vector<8x128xf32>
    %84 = arith.mulf %83, %71 : vector<8x128xf32>
    %85 = math.exp %84 : vector<8x128xf32>
    %86 = arith.mulf %81, %85 : vector<8x128xf32>
    %87 = arith.mulf %79, %57 : vector<8x128xf32>
    %88 = arith.addf %87, %86 : vector<8x128xf32>
    %89 = arith.mulf %57, %57 : vector<8x128xf32>
    %90 = arith.addf %89, %69 : vector<8x128xf32>
    %91 = arith.mulf %79, %90 : vector<8x128xf32>
    %92 = arith.mulf %57, %86 : vector<8x128xf32>
    %93 = arith.addf %91, %92 : vector<8x128xf32>
    %94 = arith.mulf %88, %88 : vector<8x128xf32>
    %95 = arith.subf %93, %94 : vector<8x128xf32>
    %cst_39 = arith.constant 9.99999997E-7 : f32
    %96 = vector.broadcast %cst_39 : f32 to vector<8x128xf32>
    %97 = arith.maximumf %95, %96 : vector<8x128xf32>
    %98 = arith.truncf %88 : vector<8x128xf32> to vector<8x128xbf16>
    %c0_40 = arith.constant 0 : index
    %c0_41 = arith.constant 0 : index
    %99 = vector.load %arg5[%c0_40, %c0_41] : memref<128x64xbf16, #tpu.memory_space<vmem>>, vector<128x64xbf16>
    %cst_42 = arith.constant dense<0.000000e+00> : vector<8x64xf32>
    %100 = tpu.matmul %98, %99, %cst_42 {dimension_numbers = #tpu.dot_dimension_numbers<[1], [0], [0], [1], [0, 0, 1, 1], [], []>} : vector<8x128xbf16>, vector<128x64xbf16>, vector<8x64xf32> -> vector<8x64xf32>
    %101 = vector.broadcast %8 : vector<1x64xf32> to vector<8x64xf32>
    %102 = arith.addf %100, %101 : vector<8x64xf32>
    %103 = arith.truncf %97 : vector<8x128xf32> to vector<8x128xbf16>
    %c0_43 = arith.constant 0 : index
    %c0_44 = arith.constant 0 : index
    %104 = vector.load %arg6[%c0_43, %c0_44] : memref<256x64xbf16, #tpu.memory_space<vmem>>, vector<128x64xbf16>
    %cst_45 = arith.constant dense<0.000000e+00> : vector<8x64xf32>
    %105 = tpu.matmul %103, %104, %cst_45 {dimension_numbers = #tpu.dot_dimension_numbers<[1], [0], [0], [1], [0, 0, 1, 1], [], []>} : vector<8x128xbf16>, vector<128x64xbf16>, vector<8x64xf32> -> vector<8x64xf32>
    %106 = arith.mulf %88, %88 : vector<8x128xf32>
    %107 = arith.truncf %106 : vector<8x128xf32> to vector<8x128xbf16>
    %c128_46 = arith.constant 128 : index
    %c0_47 = arith.constant 0 : index
    %108 = vector.load %arg6[%c128_46, %c0_47] : memref<256x64xbf16, #tpu.memory_space<vmem>>, vector<128x64xbf16>
    %cst_48 = arith.constant dense<0.000000e+00> : vector<8x64xf32>
    %109 = tpu.matmul %107, %108, %cst_48 {dimension_numbers = #tpu.dot_dimension_numbers<[1], [0], [0], [1], [0, 0, 1, 1], [], []>} : vector<8x128xbf16>, vector<128x64xbf16>, vector<8x64xf32> -> vector<8x64xf32>
    %110 = arith.addf %105, %109 : vector<8x64xf32>
    %111 = vector.broadcast %9 : vector<1x64xf32> to vector<8x64xf32>
    %112 = arith.addf %110, %111 : vector<8x64xf32>
    %cst_49 = arith.constant 9.99999997E-7 : f32
    %113 = vector.broadcast %cst_49 : f32 to vector<8x64xf32>
    %114 = arith.maximumf %112, %113 : vector<8x64xf32>
    %115 = math.rsqrt %114 : vector<8x64xf32>
    %116 = arith.mulf %102, %115 : vector<8x64xf32>
    %117 = arith.mulf %114, %115 : vector<8x64xf32>
    %cst_50 = arith.constant 0.797884583 : f32
    %118 = vector.broadcast %cst_50 : f32 to vector<8x64xf32>
    %119 = arith.mulf %118, %116 : vector<8x64xf32>
    %120 = math.tanh %119 : vector<8x64xf32>
    %cst_51 = arith.constant 1.000000e+00 : f32
    %121 = vector.broadcast %cst_51 : f32 to vector<8x64xf32>
    %122 = arith.addf %121, %120 : vector<8x64xf32>
    %cst_52 = arith.constant 5.000000e-01 : f32
    %123 = vector.broadcast %cst_52 : f32 to vector<8x64xf32>
    %124 = arith.mulf %123, %122 : vector<8x64xf32>
    %cst_53 = arith.constant 0.398942292 : f32
    %125 = vector.broadcast %cst_53 : f32 to vector<8x64xf32>
    %126 = arith.mulf %117, %125 : vector<8x64xf32>
    %cst_54 = arith.constant -5.000000e-01 : f32
    %127 = vector.broadcast %cst_54 : f32 to vector<8x64xf32>
    %128 = arith.mulf %127, %116 : vector<8x64xf32>
    %129 = arith.mulf %128, %116 : vector<8x64xf32>
    %130 = math.exp %129 : vector<8x64xf32>
    %131 = arith.mulf %126, %130 : vector<8x64xf32>
    %132 = arith.mulf %124, %102 : vector<8x64xf32>
    %133 = arith.addf %132, %131 : vector<8x64xf32>
    %134 = arith.mulf %102, %102 : vector<8x64xf32>
    %135 = arith.addf %134, %114 : vector<8x64xf32>
    %136 = arith.mulf %124, %135 : vector<8x64xf32>
    %137 = arith.mulf %102, %131 : vector<8x64xf32>
    %138 = arith.addf %136, %137 : vector<8x64xf32>
    %139 = arith.mulf %133, %133 : vector<8x64xf32>
    %140 = arith.subf %138, %139 : vector<8x64xf32>
    %cst_55 = arith.constant 9.99999997E-7 : f32
    %141 = vector.broadcast %cst_55 : f32 to vector<8x64xf32>
    %142 = arith.maximumf %140, %141 : vector<8x64xf32>
    %143 = vector.broadcast %10 : vector<1x64xf32> to vector<8x64xf32>
    %144 = arith.mulf %133, %143 : vector<8x64xf32>
    %cst_56 = arith.constant dense<0.000000e+00> : vector<8xf32>
    %145 = vector.multi_reduction <add>, %144, %cst_56 [1] : vector<8x64xf32> to vector<8xf32>
    %146 = vector.shape_cast %145 : vector<8xf32> to vector<8x1xf32>
    %147 = vector.broadcast %13 : vector<1x1xf32> to vector<8x1xf32>
    %148 = arith.addf %146, %147 : vector<8x1xf32>
    %149 = vector.broadcast %11 : vector<1x64xf32> to vector<8x64xf32>
    %150 = arith.mulf %142, %149 : vector<8x64xf32>
    %151 = arith.mulf %133, %133 : vector<8x64xf32>
    %152 = vector.broadcast %12 : vector<1x64xf32> to vector<8x64xf32>
    %153 = arith.mulf %151, %152 : vector<8x64xf32>
    %154 = arith.addf %150, %153 : vector<8x64xf32>
    %cst_57 = arith.constant dense<0.000000e+00> : vector<8xf32>
    %155 = vector.multi_reduction <add>, %154, %cst_57 [1] : vector<8x64xf32> to vector<8xf32>
    %156 = vector.shape_cast %155 : vector<8xf32> to vector<8x1xf32>
    %157 = vector.broadcast %14 : vector<1x1xf32> to vector<8x1xf32>
    %158 = arith.addf %156, %157 : vector<8x1xf32>
    %cst_58 = arith.constant 0.392699093 : f32
    %159 = vector.broadcast %cst_58 : f32 to vector<8x1xf32>
    %160 = arith.mulf %159, %158 : vector<8x1xf32>
    %cst_59 = arith.constant 1.000000e+00 : f32
    %161 = vector.broadcast %cst_59 : f32 to vector<8x1xf32>
    %162 = arith.addf %161, %160 : vector<8x1xf32>
    %163 = math.rsqrt %162 : vector<8x1xf32>
    %164 = arith.mulf %148, %163 : vector<8x1xf32>
    %165 = arith.negf %164 : vector<8x1xf32>
    %166 = math.exp %165 : vector<8x1xf32>
    %cst_60 = arith.constant 1.000000e+00 : f32
    %167 = vector.broadcast %cst_60 : f32 to vector<8x1xf32>
    %168 = arith.addf %167, %166 : vector<8x1xf32>
    %169 = arith.divf %167, %168 : vector<8x1xf32>
    %cst_61 = arith.constant -0.881373584 : f32
    %170 = vector.broadcast %cst_61 : f32 to vector<8x1xf32>
    %171 = arith.addf %148, %170 : vector<8x1xf32>
    %cst_62 = arith.constant 1.17157292 : f32
    %172 = vector.broadcast %cst_62 : f32 to vector<8x1xf32>
    %173 = arith.mulf %172, %171 : vector<8x1xf32>
    %cst_63 = arith.constant 0.539012074 : f32
    %174 = vector.broadcast %cst_63 : f32 to vector<8x1xf32>
    %175 = arith.mulf %174, %158 : vector<8x1xf32>
    %cst_64 = arith.constant 1.000000e+00 : f32
    %176 = vector.broadcast %cst_64 : f32 to vector<8x1xf32>
    %177 = arith.addf %176, %175 : vector<8x1xf32>
    %178 = math.rsqrt %177 : vector<8x1xf32>
    %179 = arith.mulf %173, %178 : vector<8x1xf32>
    %180 = arith.negf %179 : vector<8x1xf32>
    %181 = math.exp %180 : vector<8x1xf32>
    %cst_65 = arith.constant 1.000000e+00 : f32
    %182 = vector.broadcast %cst_65 : f32 to vector<8x1xf32>
    %183 = arith.addf %182, %181 : vector<8x1xf32>
    %184 = arith.divf %182, %183 : vector<8x1xf32>
    %185 = arith.mulf %169, %169 : vector<8x1xf32>
    %186 = arith.subf %184, %185 : vector<8x1xf32>
    %cst_66 = arith.constant 1.000000e+00 : f32
    %187 = vector.broadcast %cst_66 : f32 to vector<8x1xf32>
    %188 = arith.mulf %187, %186 : vector<8x1xf32>
    %189 = arith.addf %169, %188 : vector<8x1xf32>
    %c0_67 = arith.constant 0 : index
    %c0_68 = arith.constant 0 : index
    %190 = vector.load %arg8[%c0_67, %c0_68] : memref<8x1xf32, #tpu.memory_space<vmem>>, vector<8x1xf32>
    tpu.vector_store %arg8[%c0_67, %c0_68], %189 {strides = array<i32>} : memref<8x1xf32, #tpu.memory_space<vmem>>, vector<8x1xf32>,
    return
  }
  func.func @transform_0(%arg0: i32) -> (i32, i32) {
    %c0_i32 = arith.constant 0 : i32
    %c0_i32_0 = arith.constant 0 : i32
    return %arg0, %c0_i32 : i32, i32
  }
  func.func @transform_1(%arg0: i32) -> (i32, i32) {
    %c0_i32 = arith.constant 0 : i32
    %c0_i32_0 = arith.constant 0 : i32
    %c0_i32_1 = arith.constant 0 : i32
    return %c0_i32, %c0_i32_0 : i32, i32
  }
  func.func @transform_2(%arg0: i32) -> (i32, i32) {
    %c0_i32 = arith.constant 0 : i32
    %c0_i32_0 = arith.constant 0 : i32
    %c0_i32_1 = arith.constant 0 : i32
    return %c0_i32, %c0_i32_0 : i32, i32
  }
  func.func @transform_3(%arg0: i32) -> (i32, i32) {
    %c0_i32 = arith.constant 0 : i32
    %c0_i32_0 = arith.constant 0 : i32
    %c0_i32_1 = arith.constant 0 : i32
    return %c0_i32, %c0_i32_0 : i32, i32
  }
  func.func @transform_4(%arg0: i32) -> (i32, i32) {
    %c0_i32 = arith.constant 0 : i32
    %c0_i32_0 = arith.constant 0 : i32
    %c0_i32_1 = arith.constant 0 : i32
    return %c0_i32, %c0_i32_0 : i32, i32
  }
  func.func @transform_5(%arg0: i32) -> (i32, i32) {
    %c0_i32 = arith.constant 0 : i32
    %c0_i32_0 = arith.constant 0 : i32
    %c0_i32_1 = arith.constant 0 : i32
    return %c0_i32, %c0_i32_0 : i32, i32
  }
  func.func @transform_6(%arg0: i32) -> (i32, i32) {
    %c0_i32 = arith.constant 0 : i32
    %c0_i32_0 = arith.constant 0 : i32
    %c0_i32_1 = arith.constant 0 : i32
    return %c0_i32, %c0_i32_0 : i32, i32
  }
  func.func @transform_7(%arg0: i32) -> (i32, i32) {
    %c0_i32 = arith.constant 0 : i32
    %c0_i32_0 = arith.constant 0 : i32
    return %arg0, %c0_i32 : i32, i32
  }
}

</mosaic_0001>

<llo_original>
// kernel: tpu_custom_call.1
$region0: #{tpu_custom_call.1}
  #allocation0 [shape = 'u32[]', space=smem, size = 0x4, offset = 0x4, fixed_abs, tag = 'smem constant byte address 0x4 - core index']
  #allocation1 [shape = 'u32[144,128]{1,0:T(1,128)}', space=vmem, size = 0x12000, scoped, tag = 'internal scratch']
  %s0 = inlined_call_operand.vmem [shape: f32[8,140], index: 0, kind: input, shape index: {}]
  %s1 = inlined_call_operand.vmem [shape: bf16[140,256], index: 1, kind: input, shape index: {}]
  %s2 = inlined_call_operand.hbm [shape: bf16[128,128], index: 2, kind: input, shape index: {}]
  %s3 = inlined_call_operand.vmem [shape: bf16[256,128], index: 3, kind: input, shape index: {}]
  %s4 = inlined_call_operand.vmem [shape: bf16[128,64], index: 4, kind: input, shape index: {}]
  %s5 = inlined_call_operand.vmem [shape: bf16[256,64], index: 5, kind: input, shape index: {}]
  %s6 = inlined_call_operand.hbm [shape: f32[11,128], index: 6, kind: input, shape index: {}]
  %s7 = inlined_call_operand.vmem [shape: f32[8,1], index: 7, kind: output, shape index: {}]
  %s8 = sld [smem:[#allocation0]]
  $region46: #{tpu_custom_call.1} parent=0
    _
  %s10 = ssub.s32 1, %s8
  %s11 = scalar_select 0, %s10, %s8
  $region1: #{tpu_custom_call.1} parent=0
    #allocation2 [shape = 'u8[32768]{0}', space=vmem, size = 0x8000, scoped, tag = 'input window, operand 2, single buffered']
    #allocation3 [shape = 's32[1]{0}', space=sflag, size = 0x4, scoped, tag = 'scoped memory for tpu_custom_call.1']
    #allocation4 [shape = 'u8[8192]{0}', space=vmem, size = 0x2000, scoped, tag = 'input window, operand 6, single buffered']
    #allocation5 [shape = 's32[1]{0}', space=sflag, size = 0x4, scoped, tag = 'scoped memory for tpu_custom_call.1']
    %12 = vsyncpa [#allocation3], 0
    %13 = vsyncpa [#allocation5], 0
    // Predicated region
    $region2: #{tpu_custom_call.1} parent=1 // pred_check
      _
    $region3: #{tpu_custom_call.1} parent=1 // pred_check_branch
      %15 = sbr.rel (0) target = $region5
    $region4: #{tpu_custom_call.1} parent=1 // pred_region
      _
    $region5: #{tpu_custom_call.1} parent=1 // pred_fallthru
      _
    // Predicated region
    $region6: #{tpu_custom_call.1} parent=1 // pred_check
      _
    $region7: #{tpu_custom_call.1} parent=1 // pred_check_branch
      %17 = sbr.rel (0) target = $region9
    $region8: #{tpu_custom_call.1} parent=1 // pred_region
      _
    $region9: #{tpu_custom_call.1} parent=1 // pred_fallthru
      _
    // Predicated region
    $region10: #{tpu_custom_call.1} parent=1 // pred_check
      _
    $region11: #{tpu_custom_call.1} parent=1 // pred_check_branch
      %19 = sbr.rel (0) target = $region13
    $region12: #{tpu_custom_call.1} parent=1 // pred_region
      %s21 = ssub.s32 1024, 1024
      %22 = vsyncadd [#allocation3], %s21
      %s23 = sshll.u32 [#allocation2], 4
      %s24 = int_to_ptr.vmem [resolvable:$true] %s23
      %29 = dma.hbm_to_vmem [thread:$0]  %s2, 1024, %s24, [#allocation3], 64, 64, 4
    $region13: #{tpu_custom_call.1} parent=1 // pred_fallthru
      _
    // Predicated region
    $region14: #{tpu_custom_call.1} parent=1 // pred_check
      _
    $region15: #{tpu_custom_call.1} parent=1 // pred_check_branch
      %31 = sbr.rel (0) target = $region17
    $region16: #{tpu_custom_call.1} parent=1 // pred_region
      _
    $region17: #{tpu_custom_call.1} parent=1 // pred_fallthru
      _
    // Predicated region
    $region18: #{tpu_custom_call.1} parent=1 // pred_check
      _
    $region19: #{tpu_custom_call.1} parent=1 // pred_check_branch
      %33 = sbr.rel (0) target = $region21
    $region20: #{tpu_custom_call.1} parent=1 // pred_region
      _
    $region21: #{tpu_custom_call.1} parent=1 // pred_fallthru
      _
    // Predicated region
    $region22: #{tpu_custom_call.1} parent=1 // pred_check
      _
    $region23: #{tpu_custom_call.1} parent=1 // pred_check_branch
      %35 = sbr.rel (0) target = $region25
    $region24: #{tpu_custom_call.1} parent=1 // pred_region
      _
    $region25: #{tpu_custom_call.1} parent=1 // pred_fallthru
      _
    // Predicated region
    $region26: #{tpu_custom_call.1} parent=1 // pred_check
      _
    $region27: #{tpu_custom_call.1} parent=1 // pred_check_branch
      %37 = sbr.rel (0) target = $region29
    $region28: #{tpu_custom_call.1} parent=1 // pred_region
      %s39 = ssub.s32 256, 256
      %40 = vsyncadd [#allocation5], %s39
      %s41 = sshll.u32 [#allocation4], 4
      %s42 = int_to_ptr.vmem [resolvable:$true] %s41
      %47 = dma.hbm_to_vmem [thread:$0]  %s6, 256, %s42, [#allocation5], 128, 128, 8
    $region29: #{tpu_custom_call.1} parent=1 // pred_fallthru
      _
    // Predicated region
    $region30: #{tpu_custom_call.1} parent=1 // pred_check
      _
    $region31: #{tpu_custom_call.1} parent=1 // pred_check_branch
      %49 = sbr.rel (0) target = $region33
    $region32: #{tpu_custom_call.1} parent=1 // pred_region
      %50 = dma.done [#allocation3], 1024
    $region33: #{tpu_custom_call.1} parent=1 // pred_fallthru
      _
    // Predicated region
    $region34: #{tpu_custom_call.1} parent=1 // pred_check
      _
    $region35: #{tpu_custom_call.1} parent=1 // pred_check_branch
      %52 = sbr.rel (0) target = $region37
    $region36: #{tpu_custom_call.1} parent=1 // pred_region
      %53 = dma.done [#allocation5], 256
    $region37: #{tpu_custom_call.1} parent=1 // pred_fallthru
      _
    %v55 = vld [vmem:[%s0] sm:$0xff]
    %v56 = vld [vmem:[%s0 + $0x8] sm:$0xff]
    %v57 = vpack.c.bf16 %v55, %v55
    %v58 = vpack.c.bf16 %v56, %v56
    %v59 = vmul.f32 %v55, %v55
    %v60 = vmul.f32 %v56, %v56
    %v61 = vpack.c.bf16 %v59, %v59
    %v62 = vpack.c.bf16 %v60, %v60
    %v63 = vld [vmem:[#allocation4] sm:$0x1]
    %v64 = vld [vmem:[#allocation4 + $0x1] sm:$0x1]
    %v65 = vld [vmem:[#allocation4 + $0x2] sm:$0x1]
    %v66 = vld [vmem:[#allocation4 + $0x3] sm:$0x1]
    %v67 = vld [vmem:[#allocation4 + $0x4] sm:$0x1]
    %v68 = vld [vmem:[#allocation4 + $0x5] sm:$0x1]
    %v69 = vld [vmem:[#allocation4 + $0x6] sm:$0x1]
    %v70 = vld [vmem:[#allocation4 + $0x7] sm:$0x1]
    %v71 = vld [vmem:[#allocation4 + $0x8] sm:$0x1]
    %v72 = vld [vmem:[#allocation4 + $0x9] sm:$0x1]
    %v73 = vld [vmem:[#allocation4 + $0xa] sm:$0x1]
    %v74 = vld [vmem:[%s1] sm:$0xf]
    %v75 = vld [vmem:[%s1 + $0x8] sm:$0xf]
    %v76 = vld [vmem:[%s1 + $0x10] sm:$0xf]
    %v77 = vld [vmem:[%s1 + $0x18] sm:$0xf]
    %v78 = vld [vmem:[%s1 + $0x20] sm:$0xf]
    %v79 = vld [vmem:[%s1 + $0x28] sm:$0xf]
    %v80 = vld [vmem:[%s1 + $0x30] sm:$0xf]
    %v81 = vld [vmem:[%s1 + $0x38] sm:$0xf]
    %v82 = vld [vmem:[%s1 + $0x40] sm:$0xf]
    %v83 = vld [vmem:[%s1 + $0x48] sm:$0xf]
    %v84 = vld [vmem:[%s1 + $0x50] sm:$0xf]
    %v85 = vld [vmem:[%s1 + $0x58] sm:$0xf]
    %v86 = vld [vmem:[%s1 + $0x60] sm:$0xf]
    %v87 = vld [vmem:[%s1 + $0x68] sm:$0xf]
    %v88 = vld [vmem:[%s1 + $0x70] sm:$0xf]
    %v89 = vld [vmem:[%s1 + $0x78] sm:$0xf]
    %v90 = vld [vmem:[%s1 + $0x80] sm:$0xf]
    %v91 = vld [vmem:[%s1 + $0x88] sm:$0x3]
    %v92 = vlaneseq
    %v93 = vshrl.u32 %v92, 7
    %v94 = vsub.s32 0, %v93
    %v95 = vrot.slane %v63, %v94
    %v114 = vunpack.c.l.b16 %v74
    %v115 = vunpack.c.l.b16 %v75
    %v116 = vunpack.c.l.b16 %v76
    %v117 = vunpack.c.l.b16 %v77
    %v118 = vunpack.c.l.b16 %v78
    %v119 = vunpack.c.l.b16 %v79
    %v120 = vunpack.c.l.b16 %v80
    %v121 = vunpack.c.l.b16 %v81
    %v122 = vunpack.c.l.b16 %v82
    %v123 = vunpack.c.l.b16 %v83
    %v124 = vunpack.c.l.b16 %v84
    %v125 = vunpack.c.l.b16 %v85
    %v126 = vunpack.c.l.b16 %v86
    %v127 = vunpack.c.l.b16 %v87
    %v128 = vunpack.c.l.b16 %v88
    %v129 = vunpack.c.l.b16 %v89
    %v130 = vunpack.c.l.b16 %v90
    %v131 = vunpack.c.l.b16 %v91
    %v132 = vpack.c.b16 %v115, %v114
    %v133 = vpack.c.b16 %v117, %v116
    %v134 = vpack.c.b16 %v119, %v118
    %v135 = vpack.c.b16 %v121, %v120
    %v136 = vpack.c.b16 %v123, %v122
    %v137 = vpack.c.b16 %v125, %v124
    %v138 = vpack.c.b16 %v127, %v126
    %v139 = vpack.c.b16 %v129, %v128
    %v140 = vpack.c.b16 %v131, %v130
    %vm149 = vcmask 97280
    %v151 = vsel %vm149, %v58, 0
    %vm153 = vcmask 1045504
    %v155 = vsel %vm153, %v140, 0
    %157 = vmatprep.subr.bf16.mxu0 0
    %158 = vmatpush1.bf16.msra.mxu0 %v139
    %159 = vmatprep.subr.bf16.mxu0 0
    %160 = vmatpush1.bf16.msra.mxu0 %v138
    %161 = vmatprep.subr.bf16.mxu0 0
    %162 = vmatpush1.bf16.msra.mxu0 %v137
    %163 = vmatprep.subr.bf16.mxu0 0
    %164 = vmatpush1.bf16.msra.mxu0 %v136
    %165 = vmatprep.subr.bf16.mxu0 0
    %166 = vmatpush1.bf16.msra.mxu0 %v135
    %167 = vmatprep.subr.bf16.mxu0 0
    %168 = vmatpush1.bf16.msra.mxu0 %v134
    %169 = vmatprep.subr.bf16.mxu0 0
    %170 = vmatpush1.bf16.msra.mxu0 %v133
    %171 = vmatprep.subr.bf16.mxu0 0
    %172 = vmatpush1.bf16.msra.mxu0 %v132
    %173 = vmatprep.subr.bf16.mxu0 0
    %174 = vmatpush2.bf16.msra.mxu0 0
    %175 = vmatprep.subr.bf16.mxu0 0
    %176 = vmatpush2.bf16.msra.mxu0 0
    %177 = vmatprep.subr.bf16.mxu0 0
    %178 = vmatpush2.bf16.msra.mxu0 0
    %179 = vmatprep.subr.bf16.mxu0 0
    %180 = vmatpush2.bf16.msra.mxu0 0
    %181 = vmatprep.subr.bf16.mxu0 0
    %182 = vmatpush2.bf16.msra.mxu0 0
    %183 = vmatprep.subr.bf16.mxu0 0
    %184 = vmatpush2.bf16.msra.mxu0 0
    %185 = vmatprep.subr.bf16.mxu0 0
    %186 = vmatpush2.bf16.msra.mxu0 0
    %187 = vmatprep.subr.bf16.mxu0 0
    %188 = vmatpush2.bf16.msra.mxu0 %v155
    %189 = vmatprep.mubr.bf16.mxu0 %v151
    %190 = vmatmul.mubr.bf16.gmra.mxu0 %v57
    %v191 = vpop.f32.mrf.mxu0
    %v192 = vadd.f32 %v95, %v191
    %v193 = vpop.f32.mrf.mxu0
    %v194 = vpop.f32.mrf.mxu0
    %v195 = vpop.f32.mrf.mxu0
    %196 = vdwg.mxu0
    %v197 = vld [vmem:[%s1 + $0x4] sm:$0xf]
    %v198 = vld [vmem:[%s1 + $0xc] sm:$0xf]
    %v199 = vld [vmem:[%s1 + $0x14] sm:$0xf]
    %v200 = vld [vmem:[%s1 + $0x1c] sm:$0xf]
    %v201 = vld [vmem:[%s1 + $0x24] sm:$0xf]
    %v202 = vld [vmem:[%s1 + $0x2c] sm:$0xf]
    %v203 = vld [vmem:[%s1 + $0x34] sm:$0xf]
    %v204 = vld [vmem:[%s1 + $0x3c] sm:$0xf]
    %v205 = vld [vmem:[%s1 + $0x44] sm:$0xf]
    %v206 = vld [vmem:[%s1 + $0x4c] sm:$0xf]
    %v207 = vld [vmem:[%s1 + $0x54] sm:$0xf]
    %v208 = vld [vmem:[%s1 + $0x5c] sm:$0xf]
    %v209 = vld [vmem:[%s1 + $0x64] sm:$0xf]
    %v210 = vld [vmem:[%s1 + $0x6c] sm:$0xf]
    %v211 = vld [vmem:[%s1 + $0x74] sm:$0xf]
    %v212 = vld [vmem:[%s1 + $0x7c] sm:$0xf]
    %v213 = vld [vmem:[%s1 + $0x84] sm:$0xf]
    %v214 = vld [vmem:[%s1 + $0x8c] sm:$0x3]
    %v215 = vlaneseq
    %v216 = vshrl.u32 %v215, 7
    %v217 = vsub.s32 0, %v216
    %v218 = vrot.slane %v64, %v217
    %v237 = vunpack.c.l.b16 %v197
    %v238 = vunpack.c.l.b16 %v198
    %v239 = vunpack.c.l.b16 %v199
    %v240 = vunpack.c.l.b16 %v200
    %v241 = vunpack.c.l.b16 %v201
    %v242 = vunpack.c.l.b16 %v202
    %v243 = vunpack.c.l.b16 %v203
    %v244 = vunpack.c.l.b16 %v204
    %v245 = vunpack.c.l.b16 %v205
    %v246 = vunpack.c.l.b16 %v206
    %v247 = vunpack.c.l.b16 %v207
    %v248 = vunpack.c.l.b16 %v208
    %v249 = vunpack.c.l.b16 %v209
    %v250 = vunpack.c.l.b16 %v210
    %v251 = vunpack.c.l.b16 %v211
    %v252 = vunpack.c.l.b16 %v212
    %v253 = vunpack.c.l.b16 %v213
    %v254 = vunpack.c.l.b16 %v214
    %v255 = vpack.c.b16 %v238, %v237
    %v256 = vpack.c.b16 %v240, %v239
    %v257 = vpack.c.b16 %v242, %v241
    %v258 = vpack.c.b16 %v244, %v243
    %v259 = vpack.c.b16 %v246, %v245
    %v260 = vpack.c.b16 %v248, %v247
    %v261 = vpack.c.b16 %v250, %v249
    %v262 = vpack.c.b16 %v252, %v251
    %v263 = vpack.c.b16 %v254, %v253
    %v273 = vsel %vm149, %v62, 0
    %v276 = vsel %vm153, %v263, 0
    %278 = vmatprep.subr.bf16.mxu0 0
    %279 = vmatpush1.bf16.msra.mxu0 %v262
    %280 = vmatprep.subr.bf16.mxu0 0
    %281 = vmatpush1.bf16.msra.mxu0 %v261
    %282 = vmatprep.subr.bf16.mxu0 0
    %283 = vmatpush1.bf16.msra.mxu0 %v260
    %284 = vmatprep.subr.bf16.mxu0 0
    %285 = vmatpush1.bf16.msra.mxu0 %v259
    %286 = vmatprep.subr.bf16.mxu0 0
    %287 = vmatpush1.bf16.msra.mxu0 %v258
    %288 = vmatprep.subr.bf16.mxu0 0
    %289 = vmatpush1.bf16.msra.mxu0 %v257
    %290 = vmatprep.subr.bf16.mxu0 0
    %291 = vmatpush1.bf16.msra.mxu0 %v256
    %292 = vmatprep.subr.bf16.mxu0 0
    %293 = vmatpush1.bf16.msra.mxu0 %v255
    %294 = vmatprep.subr.bf16.mxu0 0
    %295 = vmatpush2.bf16.msra.mxu0 0
    %296 = vmatprep.subr.bf16.mxu0 0
    %297 = vmatpush2.bf16.msra.mxu0 0
    %298 = vmatprep.subr.bf16.mxu0 0
    %299 = vmatpush2.bf16.msra.mxu0 0
    %300 = vmatprep.subr.bf16.mxu0 0
    %301 = vmatpush2.bf16.msra.mxu0 0
    %302 = vmatprep.subr.bf16.mxu0 0
    %303 = vmatpush2.bf16.msra.mxu0 0
    %304 = vmatprep.subr.bf16.mxu0 0
    %305 = vmatpush2.bf16.msra.mxu0 0
    %306 = vmatprep.subr.bf16.mxu0 0
    %307 = vmatpush2.bf16.msra.mxu0 0
    %308 = vmatprep.subr.bf16.mxu0 0
    %309 = vmatpush2.bf16.msra.mxu0 %v276
    %310 = vmatprep.mubr.bf16.mxu0 %v273
    %311 = vmatmul.mubr.bf16.gmra.mxu0 %v61
    %v312 = vpop.f32.mrf.mxu0
    %v313 = vadd.f32 %v218, %v312
    %v314 = vpop.f32.mrf.mxu0
    %v315 = vpop.f32.mrf.mxu0
    %v316 = vpop.f32.mrf.mxu0
    %317 = vdwg.mxu0
    %v318 = vmax.f32 %v313, 1e-06
    %v319 = vrsqrt.pop %v318
    %v320 = vmul.f32 %v192, %v319
    %v321 = vmul.f32 %v318, %v319
    %v322 = vmul.f32 %v320, 0.7978846
    %v323 = vtanh.pop %v322
    %v324 = vadd.f32 %v323, 1.0
    %v325 = vmul.f32 %v324, 0.5
    %v326 = vmul.f32 %v321, 0.3989423
    %v327 = vmul.f32 %v320, -0.5
    %v328 = vmul.f32 %v327, %v320
    %v329 = vmul.f32 %v328, 1.442695
    %v330 = vpow.pop %v329
    %v331 = vmul.f32 %v326, %v330
    %v332 = vmul.f32 %v325, %v192
    %v333 = vadd.f32 %v332, %v331
    %v334 = vmul.f32 %v192, %v192
    %v335 = vadd.f32 %v334, %v318
    %v336 = vmul.f32 %v325, %v335
    %v337 = vmul.f32 %v192, %v331
    %v338 = vadd.f32 %v336, %v337
    %v339 = vmul.f32 %v333, %v333
    %v340 = vsub.f32 %v338, %v339
    %v341 = vmax.f32 %v340, 1e-06
    %v342 = vpack.c.bf16 %v333, %v333
    %v343 = vld [vmem:[#allocation2] sm:$0xf]
    %v344 = vld [vmem:[#allocation2 + $0x4] sm:$0xf]
    %v345 = vld [vmem:[#allocation2 + $0x8] sm:$0xf]
    %v346 = vld [vmem:[#allocation2 + $0xc] sm:$0xf]
    %v347 = vld [vmem:[#allocation2 + $0x10] sm:$0xf]
    %v348 = vld [vmem:[#allocation2 + $0x14] sm:$0xf]
    %v349 = vld [vmem:[#allocation2 + $0x18] sm:$0xf]
    %v350 = vld [vmem:[#allocation2 + $0x1c] sm:$0xf]
    %v351 = vld [vmem:[#allocation2 + $0x20] sm:$0xf]
    %v352 = vld [vmem:[#allocation2 + $0x24] sm:$0xf]
    %v353 = vld [vmem:[#allocation2 + $0x28] sm:$0xf]
    %v354 = vld [vmem:[#allocation2 + $0x2c] sm:$0xf]
    %v355 = vld [vmem:[#allocation2 + $0x30] sm:$0xf]
    %v356 = vld [vmem:[#allocation2 + $0x34] sm:$0xf]
    %v357 = vld [vmem:[#allocation2 + $0x38] sm:$0xf]
    %v358 = vld [vmem:[#allocation2 + $0x3c] sm:$0xf]
    %v359 = vlaneseq
    %v360 = vshrl.u32 %v359, 7
    %v361 = vsub.s32 0, %v360
    %v362 = vrot.slane %v65, %v361
    %v379 = vunpack.c.l.b16 %v343
    %v380 = vunpack.c.l.b16 %v344
    %v381 = vunpack.c.l.b16 %v345
    %v382 = vunpack.c.l.b16 %v346
    %v383 = vunpack.c.l.b16 %v347
    %v384 = vunpack.c.l.b16 %v348
    %v385 = vunpack.c.l.b16 %v349
    %v386 = vunpack.c.l.b16 %v350
    %v387 = vunpack.c.l.b16 %v351
    %v388 = vunpack.c.l.b16 %v352
    %v389 = vunpack.c.l.b16 %v353
    %v390 = vunpack.c.l.b16 %v354
    %v391 = vunpack.c.l.b16 %v355
    %v392 = vunpack.c.l.b16 %v356
    %v393 = vunpack.c.l.b16 %v357
    %v394 = vunpack.c.l.b16 %v358
    %v395 = vpack.c.b16 %v380, %v379
    %v396 = vpack.c.b16 %v382, %v381
    %v397 = vpack.c.b16 %v384, %v383
    %v398 = vpack.c.b16 %v386, %v385
    %v399 = vpack.c.b16 %v388, %v387
    %v400 = vpack.c.b16 %v390, %v389
    %v401 = vpack.c.b16 %v392, %v391
    %v402 = vpack.c.b16 %v394, %v393
    %411 = vmatprep.subr.bf16.mxu0 0
    %412 = vmatpush1.bf16.msra.mxu0 %v402
    %413 = vmatprep.subr.bf16.mxu0 0
    %414 = vmatpush1.bf16.msra.mxu0 %v401
    %415 = vmatprep.subr.bf16.mxu0 0
    %416 = vmatpush1.bf16.msra.mxu0 %v400
    %417 = vmatprep.subr.bf16.mxu0 0
    %418 = vmatpush1.bf16.msra.mxu0 %v399
    %419 = vmatprep.subr.bf16.mxu0 0
    %420 = vmatpush1.bf16.msra.mxu0 %v398
    %421 = vmatprep.subr.bf16.mxu0 0
    %422 = vmatpush1.bf16.msra.mxu0 %v397
    %423 = vmatprep.subr.bf16.mxu0 0
    %424 = vmatpush1.bf16.msra.mxu0 %v396
    %425 = vmatprep.subr.bf16.mxu0 0
    %426 = vmatpush1.bf16.msra.mxu0 %v395
    %427 = vmatprep.subr.bf16.mxu0 0
    %428 = vmatpush2.bf16.msra.mxu0 0
    %429 = vmatprep.subr.bf16.mxu0 0
    %430 = vmatpush2.bf16.msra.mxu0 0
    %431 = vmatprep.subr.bf16.mxu0 0
    %432 = vmatpush2.bf16.msra.mxu0 0
    %433 = vmatprep.subr.bf16.mxu0 0
    %434 = vmatpush2.bf16.msra.mxu0 0
    %435 = vmatprep.subr.bf16.mxu0 0
    %436 = vmatpush2.bf16.msra.mxu0 0
    %437 = vmatprep.subr.bf16.mxu0 0
    %438 = vmatpush2.bf16.msra.mxu0 0
    %439 = vmatprep.subr.bf16.mxu0 0
    %440 = vmatpush2.bf16.msra.mxu0 0
    %441 = vmatprep.subr.bf16.mxu0 0
    %442 = vmatpush2.bf16.msra.mxu0 0
    %443 = vmatprep.mubr.bf16.mxu0 0
    %444 = vmatmul.mubr.bf16.gmra.mxu0 %v342
    %v445 = vpop.f32.mrf.mxu0
    %v446 = vadd.f32 %v362, %v445
    %v447 = vpop.f32.mrf.mxu0
    %v448 = vpop.f32.mrf.mxu0
    %v449 = vpop.f32.mrf.mxu0
    %450 = vdwg.mxu0
    %v451 = vpack.c.bf16 %v341, %v341
    %v452 = vld [vmem:[%s3] sm:$0xf]
    %v453 = vld [vmem:[%s3 + $0x4] sm:$0xf]
    %v454 = vld [vmem:[%s3 + $0x8] sm:$0xf]
    %v455 = vld [vmem:[%s3 + $0xc] sm:$0xf]
    %v456 = vld [vmem:[%s3 + $0x10] sm:$0xf]
    %v457 = vld [vmem:[%s3 + $0x14] sm:$0xf]
    %v458 = vld [vmem:[%s3 + $0x18] sm:$0xf]
    %v459 = vld [vmem:[%s3 + $0x1c] sm:$0xf]
    %v460 = vld [vmem:[%s3 + $0x20] sm:$0xf]
    %v461 = vld [vmem:[%s3 + $0x24] sm:$0xf]
    %v462 = vld [vmem:[%s3 + $0x28] sm:$0xf]
    %v463 = vld [vmem:[%s3 + $0x2c] sm:$0xf]
    %v464 = vld [vmem:[%s3 + $0x30] sm:$0xf]
    %v465 = vld [vmem:[%s3 + $0x34] sm:$0xf]
    %v466 = vld [vmem:[%s3 + $0x38] sm:$0xf]
    %v467 = vld [vmem:[%s3 + $0x3c] sm:$0xf]
    %v468 = vpack.c.bf16 %v339, %v339
    %v469 = vld [vmem:[%s3 + $0x40] sm:$0xf]
    %v470 = vld [vmem:[%s3 + $0x44] sm:$0xf]
    %v471 = vld [vmem:[%s3 + $0x48] sm:$0xf]
    %v472 = vld [vmem:[%s3 + $0x4c] sm:$0xf]
    %v473 = vld [vmem:[%s3 + $0x50] sm:$0xf]
    %v474 = vld [vmem:[%s3 + $0x54] sm:$0xf]
    %v475 = vld [vmem:[%s3 + $0x58] sm:$0xf]
    %v476 = vld [vmem:[%s3 + $0x5c] sm:$0xf]
    %v477 = vld [vmem:[%s3 + $0x60] sm:$0xf]
    %v478 = vld [vmem:[%s3 + $0x64] sm:$0xf]
    %v479 = vld [vmem:[%s3 + $0x68] sm:$0xf]
    %v480 = vld [vmem:[%s3 + $0x6c] sm:$0xf]
    %v481 = vld [vmem:[%s3 + $0x70] sm:$0xf]
    %v482 = vld [vmem:[%s3 + $0x74] sm:$0xf]
    %v483 = vld [vmem:[%s3 + $0x78] sm:$0xf]
    %v484 = vld [vmem:[%s3 + $0x7c] sm:$0xf]
    %v501 = vunpack.c.l.b16 %v469
    %v502 = vunpack.c.l.b16 %v470
    %v503 = vunpack.c.l.b16 %v471
    %v504 = vunpack.c.l.b16 %v472
    %v505 = vunpack.c.l.b16 %v473
    %v506 = vunpack.c.l.b16 %v474
    %v507 = vunpack.c.l.b16 %v475
    %v508 = vunpack.c.l.b16 %v476
    %v509 = vunpack.c.l.b16 %v477
    %v510 = vunpack.c.l.b16 %v478
    %v511 = vunpack.c.l.b16 %v479
    %v512 = vunpack.c.l.b16 %v480
    %v513 = vunpack.c.l.b16 %v481
    %v514 = vunpack.c.l.b16 %v482
    %v515 = vunpack.c.l.b16 %v483
    %v516 = vunpack.c.l.b16 %v484
    %v517 = vpack.c.b16 %v502, %v501
    %v518 = vpack.c.b16 %v504, %v503
    %v519 = vpack.c.b16 %v506, %v505
    %v520 = vpack.c.b16 %v508, %v507
    %v521 = vpack.c.b16 %v510, %v509
    %v522 = vpack.c.b16 %v512, %v511
    %v523 = vpack.c.b16 %v514, %v513
    %v524 = vpack.c.b16 %v516, %v515
    %533 = vmatprep.subr.bf16.mxu0 0
    %534 = vmatpush1.bf16.msra.mxu0 %v524
    %535 = vmatprep.subr.bf16.mxu0 0
    %536 = vmatpush1.bf16.msra.mxu0 %v523
    %537 = vmatprep.subr.bf16.mxu0 0
    %538 = vmatpush1.bf16.msra.mxu0 %v522
    %539 = vmatprep.subr.bf16.mxu0 0
    %540 = vmatpush1.bf16.msra.mxu0 %v521
    %541 = vmatprep.subr.bf16.mxu0 0
    %542 = vmatpush1.bf16.msra.mxu0 %v520
    %543 = vmatprep.subr.bf16.mxu0 0
    %544 = vmatpush1.bf16.msra.mxu0 %v519
    %545 = vmatprep.subr.bf16.mxu0 0
    %546 = vmatpush1.bf16.msra.mxu0 %v518
    %547 = vmatprep.subr.bf16.mxu0 0
    %548 = vmatpush1.bf16.msra.mxu0 %v517
    %549 = vmatprep.subr.bf16.mxu0 0
    %550 = vmatpush2.bf16.msra.mxu0 0
    %551 = vmatprep.subr.bf16.mxu0 0
    %552 = vmatpush2.bf16.msra.mxu0 0
    %553 = vmatprep.subr.bf16.mxu0 0
    %554 = vmatpush2.bf16.msra.mxu0 0
    %555 = vmatprep.subr.bf16.mxu0 0
    %556 = vmatpush2.bf16.msra.mxu0 0
    %557 = vmatprep.subr.bf16.mxu0 0
    %558 = vmatpush2.bf16.msra.mxu0 0
    %559 = vmatprep.subr.bf16.mxu0 0
    %560 = vmatpush2.bf16.msra.mxu0 0
    %561 = vmatprep.subr.bf16.mxu0 0
    %562 = vmatpush2.bf16.msra.mxu0 0
    %563 = vmatprep.subr.bf16.mxu0 0
    %564 = vmatpush2.bf16.msra.mxu0 0
    %565 = vmatprep.mubr.bf16.mxu0 0
    %566 = vmatmul.mubr.bf16.gmra.mxu0 %v468
    %v567 = vpop.f32.mrf.mxu0
    %v568 = vadd.f32 0.0, %v567
    %v569 = vpop.f32.mrf.mxu0
    %v570 = vpop.f32.mrf.mxu0
    %v571 = vpop.f32.mrf.mxu0
    %572 = vdwg.mxu0
    %v589 = vunpack.c.l.b16 %v452
    %v590 = vunpack.c.l.b16 %v453
    %v591 = vunpack.c.l.b16 %v454
    %v592 = vunpack.c.l.b16 %v455
    %v593 = vunpack.c.l.b16 %v456
    %v594 = vunpack.c.l.b16 %v457
    %v595 = vunpack.c.l.b16 %v458
    %v596 = vunpack.c.l.b16 %v459
    %v597 = vunpack.c.l.b16 %v460
    %v598 = vunpack.c.l.b16 %v461
    %v599 = vunpack.c.l.b16 %v462
    %v600 = vunpack.c.l.b16 %v463
    %v601 = vunpack.c.l.b16 %v464
    %v602 = vunpack.c.l.b16 %v465
    %v603 = vunpack.c.l.b16 %v466
    %v604 = vunpack.c.l.b16 %v467
    %v605 = vpack.c.b16 %v590, %v589
    %v606 = vpack.c.b16 %v592, %v591
    %v607 = vpack.c.b16 %v594, %v593
    %v608 = vpack.c.b16 %v596, %v595
    %v609 = vpack.c.b16 %v598, %v597
    %v610 = vpack.c.b16 %v600, %v599
    %v611 = vpack.c.b16 %v602, %v601
    %v612 = vpack.c.b16 %v604, %v603
    %621 = vmatprep.subr.bf16.mxu0 0
    %622 = vmatpush1.bf16.msra.mxu0 %v612
    %623 = vmatprep.subr.bf16.mxu0 0
    %624 = vmatpush1.bf16.msra.mxu0 %v611
    %625 = vmatprep.subr.bf16.mxu0 0
    %626 = vmatpush1.bf16.msra.mxu0 %v610
    %627 = vmatprep.subr.bf16.mxu0 0
    %628 = vmatpush1.bf16.msra.mxu0 %v609
    %629 = vmatprep.subr.bf16.mxu0 0
    %630 = vmatpush1.bf16.msra.mxu0 %v608
    %631 = vmatprep.subr.bf16.mxu0 0
    %632 = vmatpush1.bf16.msra.mxu0 %v607
    %633 = vmatprep.subr.bf16.mxu0 0
    %634 = vmatpush1.bf16.msra.mxu0 %v606
    %635 = vmatprep.subr.bf16.mxu0 0
    %636 = vmatpush1.bf16.msra.mxu0 %v605
    %637 = vmatprep.subr.bf16.mxu0 0
    %638 = vmatpush2.bf16.msra.mxu0 0
    %639 = vmatprep.subr.bf16.mxu0 0
    %640 = vmatpush2.bf16.msra.mxu0 0
    %641 = vmatprep.subr.bf16.mxu0 0
    %642 = vmatpush2.bf16.msra.mxu0 0
    %643 = vmatprep.subr.bf16.mxu0 0
    %644 = vmatpush2.bf16.msra.mxu0 0
    %645 = vmatprep.subr.bf16.mxu0 0
    %646 = vmatpush2.bf16.msra.mxu0 0
    %647 = vmatprep.subr.bf16.mxu0 0
    %648 = vmatpush2.bf16.msra.mxu0 0
    %649 = vmatprep.subr.bf16.mxu0 0
    %650 = vmatpush2.bf16.msra.mxu0 0
    %651 = vmatprep.subr.bf16.mxu0 0
    %652 = vmatpush2.bf16.msra.mxu0 0
    %653 = vmatprep.mubr.bf16.mxu0 0
    %654 = vmatmul.mubr.bf16.gmra.mxu0 %v451
    %v655 = vpop.f32.mrf.mxu0
    %v656 = vadd.f32 %v568, %v655
    %v657 = vpop.f32.mrf.mxu0
    %v658 = vpop.f32.mrf.mxu0
    %v659 = vpop.f32.mrf.mxu0
    %660 = vdwg.mxu0
    %v661 = vlaneseq
    %v662 = vshrl.u32 %v661, 7
    %v663 = vsub.s32 0, %v662
    %v664 = vrot.slane %v66, %v663
    %v665 = vadd.f32 %v656, %v664
    %v666 = vmax.f32 %v665, 1e-06
    %v667 = vrsqrt.pop %v666
    %v668 = vmul.f32 %v446, %v667
    %v669 = vmul.f32 %v666, %v667
    %v670 = vmul.f32 %v668, 0.7978846
    %v671 = vtanh.pop %v670
    %v672 = vadd.f32 %v671, 1.0
    %v673 = vmul.f32 %v672, 0.5
    %v674 = vmul.f32 %v669, 0.3989423
    %v675 = vmul.f32 %v668, -0.5
    %v676 = vmul.f32 %v675, %v668
    %v677 = vmul.f32 %v676, 1.442695
    %v678 = vpow.pop %v677
    %v679 = vmul.f32 %v674, %v678
    %v680 = vmul.f32 %v673, %v446
    %v681 = vadd.f32 %v680, %v679
    %v682 = vmul.f32 %v446, %v446
    %v683 = vadd.f32 %v682, %v666
    %v684 = vmul.f32 %v673, %v683
    %v685 = vmul.f32 %v446, %v679
    %v686 = vadd.f32 %v684, %v685
    %v687 = vmul.f32 %v681, %v681
    %v688 = vsub.f32 %v686, %v687
    %v689 = vmax.f32 %v688, 1e-06
    %v690 = vpack.c.bf16 %v681, %v681
    %v691 = vld [vmem:[%s4] sm:$0xf]
    %v692 = vld [vmem:[%s4 + $0x4] sm:$0xf]
    %v693 = vld [vmem:[%s4 + $0x8] sm:$0xf]
    %v694 = vld [vmem:[%s4 + $0xc] sm:$0xf]
    %v695 = vld [vmem:[%s4 + $0x10] sm:$0xf]
    %v696 = vld [vmem:[%s4 + $0x14] sm:$0xf]
    %v697 = vld [vmem:[%s4 + $0x18] sm:$0xf]
    %v698 = vld [vmem:[%s4 + $0x1c] sm:$0xf]
    %v699 = vld [vmem:[%s4 + $0x20] sm:$0xf]
    %v700 = vld [vmem:[%s4 + $0x24] sm:$0xf]
    %v701 = vld [vmem:[%s4 + $0x28] sm:$0xf]
    %v702 = vld [vmem:[%s4 + $0x2c] sm:$0xf]
    %v703 = vld [vmem:[%s4 + $0x30] sm:$0xf]
    %v704 = vld [vmem:[%s4 + $0x34] sm:$0xf]
    %v705 = vld [vmem:[%s4 + $0x38] sm:$0xf]
    %v706 = vld [vmem:[%s4 + $0x3c] sm:$0xf]
    %v707 = vlaneseq
    %v708 = vshrl.u32 %v707, 7
    %v709 = vsub.s32 0, %v708
    %v710 = vrot.slane %v67, %v709
    %v727 = vunpack.c.l.b16 %v691
    %v728 = vunpack.c.l.b16 %v692
    %v729 = vunpack.c.l.b16 %v693
    %v730 = vunpack.c.l.b16 %v694
    %v731 = vunpack.c.l.b16 %v695
    %v732 = vunpack.c.l.b16 %v696
    %v733 = vunpack.c.l.b16 %v697
    %v734 = vunpack.c.l.b16 %v698
    %v735 = vunpack.c.l.b16 %v699
    %v736 = vunpack.c.l.b16 %v700
    %v737 = vunpack.c.l.b16 %v701
    %v738 = vunpack.c.l.b16 %v702
    %v739 = vunpack.c.l.b16 %v703
    %v740 = vunpack.c.l.b16 %v704
    %v741 = vunpack.c.l.b16 %v705
    %v742 = vunpack.c.l.b16 %v706
    %v743 = vpack.c.b16 %v728, %v727
    %v744 = vpack.c.b16 %v730, %v729
    %v745 = vpack.c.b16 %v732, %v731
    %v746 = vpack.c.b16 %v734, %v733
    %v747 = vpack.c.b16 %v736, %v735
    %v748 = vpack.c.b16 %v738, %v737
    %v749 = vpack.c.b16 %v740, %v739
    %v750 = vpack.c.b16 %v742, %v741
    %759 = vmatprep.subr.bf16.mxu0 0
    %760 = vmatpush1.bf16.msra.mxu0 %v750
    %761 = vmatprep.subr.bf16.mxu0 0
    %762 = vmatpush1.bf16.msra.mxu0 %v749
    %763 = vmatprep.subr.bf16.mxu0 0
    %764 = vmatpush1.bf16.msra.mxu0 %v748
    %765 = vmatprep.subr.bf16.mxu0 0
    %766 = vmatpush1.bf16.msra.mxu0 %v747
    %767 = vmatprep.subr.bf16.mxu0 0
    %768 = vmatpush1.bf16.msra.mxu0 %v746
    %769 = vmatprep.subr.bf16.mxu0 0
    %770 = vmatpush1.bf16.msra.mxu0 %v745
    %771 = vmatprep.subr.bf16.mxu0 0
    %772 = vmatpush1.bf16.msra.mxu0 %v744
    %773 = vmatprep.subr.bf16.mxu0 0
    %774 = vmatpush1.bf16.msra.mxu0 %v743
    %775 = vmatprep.subr.bf16.mxu0 0
    %776 = vmatpush2.bf16.msra.mxu0 0
    %777 = vmatprep.subr.bf16.mxu0 0
    %778 = vmatpush2.bf16.msra.mxu0 0
    %779 = vmatprep.subr.bf16.mxu0 0
    %780 = vmatpush2.bf16.msra.mxu0 0
    %781 = vmatprep.subr.bf16.mxu0 0
    %782 = vmatpush2.bf16.msra.mxu0 0
    %783 = vmatprep.subr.bf16.mxu0 0
    %784 = vmatpush2.bf16.msra.mxu0 0
    %785 = vmatprep.subr.bf16.mxu0 0
    %786 = vmatpush2.bf16.msra.mxu0 0
    %787 = vmatprep.subr.bf16.mxu0 0
    %788 = vmatpush2.bf16.msra.mxu0 0
    %789 = vmatprep.subr.bf16.mxu0 0
    %790 = vmatpush2.bf16.msra.mxu0 0
    %791 = vmatprep.mubr.bf16.mxu0 0
    %792 = vmatmul.mubr.bf16.gmra.mxu0 %v690
    %v793 = vpop.f32.mrf.mxu0
    %v794 = vadd.f32 %v710, %v793
    %v795 = vpop.f32.mrf.mxu0
    %v796 = vpop.f32.mrf.mxu0
    %v797 = vpop.f32.mrf.mxu0
    %798 = vdwg.mxu0
    %v799 = vpack.c.bf16 %v689, %v689
    %v800 = vld [vmem:[%s5] sm:$0xf]
    %v801 = vld [vmem:[%s5 + $0x4] sm:$0xf]
    %v802 = vld [vmem:[%s5 + $0x8] sm:$0xf]
    %v803 = vld [vmem:[%s5 + $0xc] sm:$0xf]
    %v804 = vld [vmem:[%s5 + $0x10] sm:$0xf]
    %v805 = vld [vmem:[%s5 + $0x14] sm:$0xf]
    %v806 = vld [vmem:[%s5 + $0x18] sm:$0xf]
    %v807 = vld [vmem:[%s5 + $0x1c] sm:$0xf]
    %v808 = vld [vmem:[%s5 + $0x20] sm:$0xf]
    %v809 = vld [vmem:[%s5 + $0x24] sm:$0xf]
    %v810 = vld [vmem:[%s5 + $0x28] sm:$0xf]
    %v811 = vld [vmem:[%s5 + $0x2c] sm:$0xf]
    %v812 = vld [vmem:[%s5 + $0x30] sm:$0xf]
    %v813 = vld [vmem:[%s5 + $0x34] sm:$0xf]
    %v814 = vld [vmem:[%s5 + $0x38] sm:$0xf]
    %v815 = vld [vmem:[%s5 + $0x3c] sm:$0xf]
    %v816 = vpack.c.bf16 %v687, %v687
    %v817 = vld [vmem:[%s5 + $0x40] sm:$0xf]
    %v818 = vld [vmem:[%s5 + $0x44] sm:$0xf]
    %v819 = vld [vmem:[%s5 + $0x48] sm:$0xf]
    %v820 = vld [vmem:[%s5 + $0x4c] sm:$0xf]
    %v821 = vld [vmem:[%s5 + $0x50] sm:$0xf]
    %v822 = vld [vmem:[%s5 + $0x54] sm:$0xf]
    %v823 = vld [vmem:[%s5 + $0x58] sm:$0xf]
    %v824 = vld [vmem:[%s5 + $0x5c] sm:$0xf]
    %v825 = vld [vmem:[%s5 + $0x60] sm:$0xf]
    %v826 = vld [vmem:[%s5 + $0x64] sm:$0xf]
    %v827 = vld [vmem:[%s5 + $0x68] sm:$0xf]
    %v828 = vld [vmem:[%s5 + $0x6c] sm:$0xf]
    %v829 = vld [vmem:[%s5 + $0x70] sm:$0xf]
    %v830 = vld [vmem:[%s5 + $0x74] sm:$0xf]
    %v831 = vld [vmem:[%s5 + $0x78] sm:$0xf]
    %v832 = vld [vmem:[%s5 + $0x7c] sm:$0xf]
    %v849 = vunpack.c.l.b16 %v817
    %v850 = vunpack.c.l.b16 %v818
    %v851 = vunpack.c.l.b16 %v819
    %v852 = vunpack.c.l.b16 %v820
    %v853 = vunpack.c.l.b16 %v821
    %v854 = vunpack.c.l.b16 %v822
    %v855 = vunpack.c.l.b16 %v823
    %v856 = vunpack.c.l.b16 %v824
    %v857 = vunpack.c.l.b16 %v825
    %v858 = vunpack.c.l.b16 %v826
    %v859 = vunpack.c.l.b16 %v827
    %v860 = vunpack.c.l.b16 %v828
    %v861 = vunpack.c.l.b16 %v829
    %v862 = vunpack.c.l.b16 %v830
    %v863 = vunpack.c.l.b16 %v831
    %v864 = vunpack.c.l.b16 %v832
    %v865 = vpack.c.b16 %v850, %v849
    %v866 = vpack.c.b16 %v852, %v851
    %v867 = vpack.c.b16 %v854, %v853
    %v868 = vpack.c.b16 %v856, %v855
    %v869 = vpack.c.b16 %v858, %v857
    %v870 = vpack.c.b16 %v860, %v859
    %v871 = vpack.c.b16 %v862, %v861
    %v872 = vpack.c.b16 %v864, %v863
    %881 = vmatprep.subr.bf16.mxu0 0
    %882 = vmatpush1.bf16.msra.mxu0 %v872
    %883 = vmatprep.subr.bf16.mxu0 0
    %884 = vmatpush1.bf16.msra.mxu0 %v871
    %885 = vmatprep.subr.bf16.mxu0 0
    %886 = vmatpush1.bf16.msra.mxu0 %v870
    %887 = vmatprep.subr.bf16.mxu0 0
    %888 = vmatpush1.bf16.msra.mxu0 %v869
    %889 = vmatprep.subr.bf16.mxu0 0
    %890 = vmatpush1.bf16.msra.mxu0 %v868
    %891 = vmatprep.subr.bf16.mxu0 0
    %892 = vmatpush1.bf16.msra.mxu0 %v867
    %893 = vmatprep.subr.bf16.mxu0 0
    %894 = vmatpush1.bf16.msra.mxu0 %v866
    %895 = vmatprep.subr.bf16.mxu0 0
    %896 = vmatpush1.bf16.msra.mxu0 %v865
    %897 = vmatprep.subr.bf16.mxu0 0
    %898 = vmatpush2.bf16.msra.mxu0 0
    %899 = vmatprep.subr.bf16.mxu0 0
    %900 = vmatpush2.bf16.msra.mxu0 0
    %901 = vmatprep.subr.bf16.mxu0 0
    %902 = vmatpush2.bf16.msra.mxu0 0
    %903 = vmatprep.subr.bf16.mxu0 0
    %904 = vmatpush2.bf16.msra.mxu0 0
    %905 = vmatprep.subr.bf16.mxu0 0
    %906 = vmatpush2.bf16.msra.mxu0 0
    %907 = vmatprep.subr.bf16.mxu0 0
    %908 = vmatpush2.bf16.msra.mxu0 0
    %909 = vmatprep.subr.bf16.mxu0 0
    %910 = vmatpush2.bf16.msra.mxu0 0
    %911 = vmatprep.subr.bf16.mxu0 0
    %912 = vmatpush2.bf16.msra.mxu0 0
    %913 = vmatprep.mubr.bf16.mxu0 0
    %914 = vmatmul.mubr.bf16.gmra.mxu0 %v816
    %v915 = vpop.f32.mrf.mxu0
    %v916 = vadd.f32 0.0, %v915
    %v917 = vpop.f32.mrf.mxu0
    %v918 = vpop.f32.mrf.mxu0
    %v919 = vpop.f32.mrf.mxu0
    %920 = vdwg.mxu0
    %v937 = vunpack.c.l.b16 %v800
    %v938 = vunpack.c.l.b16 %v801
    %v939 = vunpack.c.l.b16 %v802
    %v940 = vunpack.c.l.b16 %v803
    %v941 = vunpack.c.l.b16 %v804
    %v942 = vunpack.c.l.b16 %v805
    %v943 = vunpack.c.l.b16 %v806
    %v944 = vunpack.c.l.b16 %v807
    %v945 = vunpack.c.l.b16 %v808
    %v946 = vunpack.c.l.b16 %v809
    %v947 = vunpack.c.l.b16 %v810
    %v948 = vunpack.c.l.b16 %v811
    %v949 = vunpack.c.l.b16 %v812
    %v950 = vunpack.c.l.b16 %v813
    %v951 = vunpack.c.l.b16 %v814
    %v952 = vunpack.c.l.b16 %v815
    %v953 = vpack.c.b16 %v938, %v937
    %v954 = vpack.c.b16 %v940, %v939
    %v955 = vpack.c.b16 %v942, %v941
    %v956 = vpack.c.b16 %v944, %v943
    %v957 = vpack.c.b16 %v946, %v945
    %v958 = vpack.c.b16 %v948, %v947
    %v959 = vpack.c.b16 %v950, %v949
    %v960 = vpack.c.b16 %v952, %v951
    %969 = vmatprep.subr.bf16.mxu0 0
    %970 = vmatpush1.bf16.msra.mxu0 %v960
    %971 = vmatprep.subr.bf16.mxu0 0
    %972 = vmatpush1.bf16.msra.mxu0 %v959
    %973 = vmatprep.subr.bf16.mxu0 0
    %974 = vmatpush1.bf16.msra.mxu0 %v958
    %975 = vmatprep.subr.bf16.mxu0 0
    %976 = vmatpush1.bf16.msra.mxu0 %v957
    %977 = vmatprep.subr.bf16.mxu0 0
    %978 = vmatpush1.bf16.msra.mxu0 %v956
    %979 = vmatprep.subr.bf16.mxu0 0
    %980 = vmatpush1.bf16.msra.mxu0 %v955
    %981 = vmatprep.subr.bf16.mxu0 0
    %982 = vmatpush1.bf16.msra.mxu0 %v954
    %983 = vmatprep.subr.bf16.mxu0 0
    %984 = vmatpush1.bf16.msra.mxu0 %v953
    %985 = vmatprep.subr.bf16.mxu0 0
    %986 = vmatpush2.bf16.msra.mxu0 0
    %987 = vmatprep.subr.bf16.mxu0 0
    %988 = vmatpush2.bf16.msra.mxu0 0
    %989 = vmatprep.subr.bf16.mxu0 0
    %990 = vmatpush2.bf16.msra.mxu0 0
    %991 = vmatprep.subr.bf16.mxu0 0
    %992 = vmatpush2.bf16.msra.mxu0 0
    %993 = vmatprep.subr.bf16.mxu0 0
    %994 = vmatpush2.bf16.msra.mxu0 0
    %995 = vmatprep.subr.bf16.mxu0 0
    %996 = vmatpush2.bf16.msra.mxu0 0
    %997 = vmatprep.subr.bf16.mxu0 0
    %998 = vmatpush2.bf16.msra.mxu0 0
    %999 = vmatprep.subr.bf16.mxu0 0
    %1000 = vmatpush2.bf16.msra.mxu0 0
    %1001 = vmatprep.mubr.bf16.mxu0 0
    %1002 = vmatmul.mubr.bf16.gmra.mxu0 %v799
    %v1003 = vpop.f32.mrf.mxu0
    %v1004 = vadd.f32 %v916, %v1003
    %v1005 = vpop.f32.mrf.mxu0
    %v1006 = vpop.f32.mrf.mxu0
    %v1007 = vpop.f32.mrf.mxu0
    %1008 = vdwg.mxu0
    %v1009 = vlaneseq
    %v1010 = vshrl.u32 %v1009, 7
    %v1011 = vsub.s32 0, %v1010
    %v1012 = vrot.slane %v68, %v1011
    %v1013 = vadd.f32 %v1004, %v1012
    %v1014 = vmax.f32 %v1013, 1e-06
    %v1015 = vrsqrt.pop %v1014
    %v1016 = vmul.f32 %v794, %v1015
    %v1017 = vmul.f32 %v1014, %v1015
    %v1018 = vmul.f32 %v1016, 0.7978846
    %v1019 = vtanh.pop %v1018
    %v1020 = vadd.f32 %v1019, 1.0
    %v1021 = vmul.f32 %v1020, 0.5
    %v1022 = vmul.f32 %v1017, 0.3989423
    %v1023 = vmul.f32 %v1016, -0.5
    %v1024 = vmul.f32 %v1023, %v1016
    %v1025 = vmul.f32 %v1024, 1.442695
    %v1026 = vpow.pop %v1025
    %v1027 = vmul.f32 %v1022, %v1026
    %v1028 = vmul.f32 %v1021, %v794
    %v1029 = vadd.f32 %v1028, %v1027
    %v1030 = vmul.f32 %v794, %v794
    %v1031 = vadd.f32 %v1030, %v1014
    %v1032 = vmul.f32 %v1021, %v1031
    %v1033 = vmul.f32 %v794, %v1027
    %v1034 = vadd.f32 %v1032, %v1033
    %v1035 = vmul.f32 %v1029, %v1029
    %v1036 = vsub.f32 %v1034, %v1035
    %v1037 = vmax.f32 %v1036, 1e-06
    %v1038 = vlaneseq
    %v1039 = vshrl.u32 %v1038, 7
    %v1040 = vsub.s32 0, %v1039
    %v1041 = vrot.slane %v69, %v1040
    %v1042 = vmul.f32 %v1029, %v1041
    %vm1043 = vcmask 523264
    %v1044 = vsel %vm1043, %v1042, 0.0
    %1045 = vadd.xlane.f32.xlu0 %v1044
    %v1046 = vpop.xlane.xlu0 %1045
    %v1047 = vlaneseq
    %v1048 = vshrl.u32 %v1047, 7
    %v1049 = vsub.s32 0, %v1048
    %v1050 = vrot.slane %v72, %v1049
    %v1051 = vadd.f32 %v1046, %v1050
    %v1052 = vlaneseq
    %v1053 = vshrl.u32 %v1052, 7
    %v1054 = vsub.s32 0, %v1053
    %v1055 = vrot.slane %v70, %v1054
    %v1056 = vmul.f32 %v1037, %v1055
    %v1057 = vlaneseq
    %v1058 = vshrl.u32 %v1057, 7
    %v1059 = vsub.s32 0, %v1058
    %v1060 = vrot.slane %v71, %v1059
    %v1061 = vmul.f32 %v1035, %v1060
    %v1062 = vadd.f32 %v1056, %v1061
    %v1063 = vsel %vm1043, %v1062, 0.0
    %1064 = vadd.xlane.f32.xlu0 %v1063
    %v1065 = vpop.xlane.xlu0 %1064
    %v1066 = vlaneseq
    %v1067 = vshrl.u32 %v1066, 7
    %v1068 = vsub.s32 0, %v1067
    %v1069 = vrot.slane %v73, %v1068
    %v1070 = vadd.f32 %v1065, %v1069
    %v1071 = vmul.f32 %v1070, 0.3926991
    %v1072 = vadd.f32 %v1071, 1.0
    %v1073 = vrsqrt.pop %v1072
    %v1074 = vmul.f32 %v1051, %v1073
    %v1075 = vxor.u32 %v1074, 2147483648
    %v1076 = vmul.f32 %v1075, 1.442695
    %v1077 = vpow.pop %v1076
    %v1078 = vadd.f32 %v1077, 1.0
    %v1079 = vrcp.pop %v1078
    %v1080 = vmul.f32 1.0, %v1079
    %v1081 = vadd.f32 %v1051, -0.8813736
    %v1082 = vmul.f32 %v1081, 1.1715729
    %v1083 = vmul.f32 %v1070, 0.5390121
    %v1084 = vadd.f32 %v1083, 1.0
    %v1085 = vrsqrt.pop %v1084
    %v1086 = vmul.f32 %v1082, %v1085
    %v1087 = vxor.u32 %v1086, 2147483648
    %v1088 = vmul.f32 %v1087, 1.442695
    %v1089 = vpow.pop %v1088
    %v1090 = vadd.f32 %v1089, 1.0
    %v1091 = vrcp.pop %v1090
    %v1092 = vmul.f32 1.0, %v1091
    %v1093 = vmul.f32 %v1080, %v1080
    %v1094 = vsub.f32 %v1092, %v1093
    %v1095 = vadd.f32 %v1080, %v1094
    %vm1096 = vcmask 7168
    %1097 = vst.msk [vmem:[%s7] sm:$0xff] %vm1096, %v1095
    // Predicated region
    $region38: #{tpu_custom_call.1} parent=1 // pred_check
      _
    $region39: #{tpu_custom_call.1} parent=1 // pred_check_branch
      %1099 = sbr.rel (0) target = $region41
    $region40: #{tpu_custom_call.1} parent=1 // pred_region
      _
    $region41: #{tpu_custom_call.1} parent=1 // pred_fallthru
      _
    // Predicated region
    $region42: #{tpu_custom_call.1} parent=1 // pred_check
      _
    $region43: #{tpu_custom_call.1} parent=1 // pred_check_branch
      %1101 = sbr.rel (0) target = $region45
    $region44: #{tpu_custom_call.1} parent=1 // pred_region
      _
    $region45: #{tpu_custom_call.1} parent=1 // pred_fallthru
      _
    %1102 = vsyncpa [#allocation3], 1
    %1103 = vsyncpa [#allocation5], 1

</llo_original>
